<compile_context>
chip_gen: v5e
topology: v5e:2x2
jax: 0.10.0
libtpu: 0.0.40
codegen_flags: <defaults>
</compile_context>

<pallas_src>
import functools

import jax
import jax.numpy as jnp
from jax.experimental import pallas as pl
from jax.experimental.pallas import tpu as pltpu


def _round_up(x, m):
    return ((x + m - 1) // m) * m


def _vmem_capacity_bytes():
    try:
        info = pltpu.get_tpu_info()
        cap = getattr(info, "vmem_capacity_bytes", None)
        if cap:
            return int(cap)
    except Exception:
        pass
    return 64 * 1024 * 1024  # conservative fallback: v7x per-TensorCore VMEM


def _lm_criterion_kernel(y_ref, side_ref, loss_ref, msum_ref, *,
                         chunks_per_split, row_tile, n_rows):
    c = pl.program_id(0)   # split axis ("parallel")
    i = pl.program_id(1)   # reduction-chunk axis ("arbitrary")

    @pl.when(i == 0)
    def _():
        loss_ref[...] = jnp.zeros_like(loss_ref)
        msum_ref[...] = jnp.zeros_like(msum_ref)

    y = y_ref[...]                           # (row_tile, V), native dtype
    side = side_ref[...]                     # (row_tile, 2) f32: [target, mask]
    tgt = side[:, 0:1].astype(jnp.int32)     # (row_tile, 1)
    msk = side[:, 1:2]                       # (row_tile, 1) f32

    rows, vocab = y.shape
    # One-hot gather: (1, V) lane iota, broadcast inside the compare; scalar-0
    # select arm.  Row-sum is exact even in bf16 (at most one non-zero lane).
    lane_ids = jax.lax.broadcasted_iota(jnp.int32, (1, vocab), 1)
    picked = jnp.sum(
        jnp.where(lane_ids == tgt, y, 0), axis=-1, keepdims=True
    ).astype(jnp.float32)

    # Row validity: handles the ragged last block and any clamped duplicate
    # block — no host-side padding of the (N, V) tensor ever happens.
    global_chunk = c * chunks_per_split + i
    row_start = global_chunk * row_tile
    row_ids = row_start + jax.lax.broadcasted_iota(jnp.int32, (rows, 1), 0)
    valid = row_ids < n_rows

    loss_rows = jnp.where(valid, -picked * msk, 0.0)
    msum_rows = jnp.where(valid, msk, 0.0)

    loss_ref[...] += jnp.sum(loss_rows).reshape(1, 1, 1)
    msum_ref[...] += jnp.sum(msum_rows).reshape(1, 1, 1)


def language_model_criterion(inuptY, target, mask, *, row_tile=None):
    """inuptY: (B, T, V) float; target: (B, T) int; mask: (B, T) float -> scalar."""
    B, T, V = inuptY.shape
    N = B * T

    y = inuptY.reshape(N, V)                 # native dtype, never padded/copied
    side = jnp.concatenate(
        [target.reshape(N, 1).astype(jnp.float32),   # exact for V < 2^24
         mask.reshape(N, 1).astype(jnp.float32)],
        axis=1,
    )                                        # (N, 2) packed side array

    itemsize = y.dtype.itemsize
    sublane = max(8, 32 // max(1, itemsize))  # 8 f32 / 16 bf16 / 32 int8-fp8
    vmem_cap = _vmem_capacity_bytes()

    if row_tile is None:
        # ~4-8 MiB Y block per step (already at ~HBM roofline; bigger only adds
        # VMEM pressure and kills pipelining for moderate N).
        rt = max(sublane, (6 << 20) // max(1, V * itemsize))
        # dtype-aware per-row VMEM accounting:
        #   2x double-buffered Y + select-output temp + i32 compare temps
        #   + predicate, plus the lane-padded double-buffered side block.
        per_row = (2 * itemsize + itemsize + 4 + 1) * V + 2 * 128 * 4
        rt = min(rt, max(sublane, int(0.45 * vmem_cap) // per_row))
        # Guarantee >= 4 chunks per split (assuming up to 2 splits) so the Y
        # DMA and the VPU/XLU pass overlap.
        rt = min(rt, max(sublane, pl.cdiv(N, 2) // 4))
        row_tile = max(sublane, (rt // sublane) * sublane)
    else:
        row_tile = max(sublane, _round_up(row_tile, sublane))

    total_chunks = pl.cdiv(N, row_tile)
    num_splits = 2 if total_chunks >= 8 else 1
    cps = pl.cdiv(total_chunks, num_splits)

    if num_splits * cps == total_chunks:
        data_map = lambda c, i: (c * cps + i, 0)
    else:
        last = total_chunks - 1
        # Clamp so block starts never leave the array; the duplicated block's
        # contribution is zeroed by the in-kernel row-validity mask.
        data_map = lambda c, i: (jnp.minimum(c * cps + i, last), 0)

    # vmem_limit sized from the actual per-step footprint + margin.
    y_block_bytes = row_tile * V * itemsize
    footprint = (2 * y_block_bytes                     # double-buffered Y
                 + 2 * row_tile * 128 * 4              # double-buffered side (lane padded)
                 + row_tile * V * (itemsize + 4 + 1))  # select/compare temps
    vmem_limit = int(min(vmem_cap, max(32 << 20, footprint + (16 << 20))))

    kernel = functools.partial(
        _lm_criterion_kernel,
        chunks_per_split=cps, row_tile=row_tile, n_rows=N,
    )

    loss_parts, msum_parts = pl.pallas_call(
        kernel,
        out_shape=(
            jax.ShapeDtypeStruct((num_splits, 1, 1), jnp.float32),
            jax.ShapeDtypeStruct((num_splits, 1, 1), jnp.float32),
        ),
        grid_spec=pltpu.PrefetchScalarGridSpec(
            num_scalar_prefetch=0,
            grid=(num_splits, cps),
            in_specs=[
                pl.BlockSpec((row_tile, V), data_map),
                pl.BlockSpec((row_tile, 2), data_map),
            ],
            out_specs=[
                pl.BlockSpec((1, 1, 1), lambda c, i: (c, 0, 0)),
                pl.BlockSpec((1, 1, 1), lambda c, i: (c, 0, 0)),
            ],
        ),
        compiler_params=pltpu.CompilerParams(
            dimension_semantics=("parallel", "arbitrary"),
            vmem_limit_bytes=vmem_limit,
        ),
        cost_estimate=pl.CostEstimate(
            flops=3 * N * V,
            transcendentals=0,
            bytes_accessed=N * V * itemsize + N * 2 * 4 + num_splits * 2 * 4,
        ),
    )(y, side)

    # Final reduce + divide in the wrapper (matches PyTorch, incl. NaN on 0/0).
    return jnp.sum(loss_parts) / jnp.sum(msum_parts)


def _reference(inuptY, target, mask):
    V = inuptY.shape[-1]
    y_flat = inuptY.reshape(-1, V)
    t_flat = target.reshape(-1)
    m_flat = mask.reshape(-1).astype(jnp.float32)
    picked = jnp.take_along_axis(y_flat, t_flat[:, None], axis=1)[:, 0].astype(jnp.float32)
    return jnp.sum(-picked * m_flat) / jnp.sum(m_flat)


if __name__ == "__main__":
    key = jax.random.PRNGKey(0)
    k1, k2, k3, k4, k5, k6, k7, k8, k9 = jax.random.split(key, 9)

    # Test 1: f32, tile-aligned row count.
    B, T, V = 2, 8, 32
    logits = jax.random.normal(k1, (B, T, V), dtype=jnp.float32)
    inuptY = jax.nn.log_softmax(logits, axis=-1)
    target = jax.random.randint(k2, (B, T), 0, V, dtype=jnp.int32)
    mask = (jax.random.uniform(k3, (B, T)) > 0.3).astype(jnp.float32)
    mask = mask.at[0, 0].set(1.0)

    loss = jax.block_until_ready(language_model_criterion(inuptY, target, mask))
    ref = _reference(inuptY, target, mask)
    assert jnp.allclose(loss, ref, rtol=1e-5, atol=1e-5), (loss, ref)

    # Test 2: f32, ragged row count (exercises in-kernel row-validity mask,
    # no host-side padding of y).
    B2, T2, V2 = 3, 5, 48
    logits2 = jax.random.normal(k4, (B2, T2, V2), dtype=jnp.float32)
    inuptY2 = jax.nn.log_softmax(logits2, axis=-1)
    target2 = jax.random.randint(k5, (B2, T2), 0, V2, dtype=jnp.int32)
    mask2 = (jax.random.uniform(k6, (B2, T2)) > 0.3).astype(jnp.float32)
    mask2 = mask2.at[0, 0].set(1.0)

    loss2 = jax.block_until_ready(language_model_criterion(inuptY2, target2, mask2))
    ref2 = _reference(inuptY2, target2, mask2)
    assert jnp.allclose(loss2, ref2, rtol=1e-5, atol=1e-5), (loss2, ref2)

    # Test 3: bf16 log-probs, ragged rows (native-dtype streaming + 16-row
    # packed sublane tiling).
    B3, T3, V3 = 2, 9, 64
    logits3 = jax.random.normal(k7, (B3, T3, V3), dtype=jnp.float32)
    inuptY3 = jax.nn.log_softmax(logits3, axis=-1).astype(jnp.bfloat16)
    target3 = jax.random.randint(k8, (B3, T3), 0, V3, dtype=jnp.int32)
    mask3 = (jax.random.uniform(k9, (B3, T3)) > 0.3).astype(jnp.float32)
    mask3 = mask3.at[0, 0].set(1.0)

    loss3 = jax.block_until_ready(language_model_criterion(inuptY3, target3, mask3))
    ref3 = _reference(inuptY3, target3, mask3)
    assert jnp.allclose(loss3, ref3, rtol=1e-4, atol=1e-4), (loss3, ref3)

    print("KERNEL_OK")
</pallas_src>

<mosaic_0001>
module attributes {stable_mosaic.version = 11 : i64} {
  func.func @_lm_criterion_kernel(%arg0: i32, %arg1: i32, %arg2: memref<8x32xf32, #tpu.memory_space<vmem>>, %arg3: memref<8x2xf32, #tpu.memory_space<vmem>>, %arg4: memref<1x1x1xf32, #tpu.memory_space<vmem>>, %arg5: memref<1x1x1xf32, #tpu.memory_space<vmem>>) attributes {dimension_semantics = [#tpu.dimension_semantics<parallel>, #tpu.dimension_semantics<arbitrary>], iteration_bounds = array<i64: 1, 2>, scalar_prefetch = 0 : i64, scratch_operands = 0 : i64, tpu.core_type = #tpu.core_type<tc>, window_params = [{transform_indices = @transform_0, window_bounds = array<i64: 8, 32>}, {transform_indices = @transform_1, window_bounds = array<i64: 8, 2>}, {transform_indices = @transform_2, window_bounds = array<i64: 1, 1, 1>}, {transform_indices = @transform_3, window_bounds = array<i64: 1, 1, 1>}]} {
    %c0_i32 = arith.constant 0 : i32
    %0 = arith.cmpi eq, %arg1, %c0_i32 : i32
    %1 = arith.extui %0 : i1 to i32
    %c0_i32_0 = arith.constant 0 : i32
    %2 = arith.cmpi ne, %1, %c0_i32_0 : i32
    scf.if %2 {
      %cst_22 = arith.constant 0.000000e+00 : f32
      %48 = vector.broadcast %cst_22 : f32 to vector<1x1x1xf32>
      %c0_23 = arith.constant 0 : index
      %c0_24 = arith.constant 0 : index
      %c0_25 = arith.constant 0 : index
      %49 = vector.load %arg4[%c0_23, %c0_24, %c0_25] : memref<1x1x1xf32, #tpu.memory_space<vmem>>, vector<1x1x1xf32>
      tpu.vector_store %arg4[%c0_23, %c0_24, %c0_25], %48 {strides = array<i32>} : memref<1x1x1xf32, #tpu.memory_space<vmem>>, vector<1x1x1xf32>,
      %cst_26 = arith.constant 0.000000e+00 : f32
      %50 = vector.broadcast %cst_26 : f32 to vector<1x1x1xf32>
      %c0_27 = arith.constant 0 : index
      %c0_28 = arith.constant 0 : index
      %c0_29 = arith.constant 0 : index
      %51 = vector.load %arg5[%c0_27, %c0_28, %c0_29] : memref<1x1x1xf32, #tpu.memory_space<vmem>>, vector<1x1x1xf32>
      tpu.vector_store %arg5[%c0_27, %c0_28, %c0_29], %50 {strides = array<i32>} : memref<1x1x1xf32, #tpu.memory_space<vmem>>, vector<1x1x1xf32>,
    } else {
    }
    %c0 = arith.constant 0 : index
    %c0_1 = arith.constant 0 : index
    %3 = vector.load %arg2[%c0, %c0_1] : memref<8x32xf32, #tpu.memory_space<vmem>>, vector<8x32xf32>
    %c0_2 = arith.constant 0 : index
    %c0_3 = arith.constant 0 : index
    %4 = vector.load %arg3[%c0_2, %c0_3] : memref<8x2xf32, #tpu.memory_space<vmem>>, vector<8x2xf32>
    %5 = vector.extract_strided_slice %4 {offsets = [0, 0], sizes = [8, 1], strides = [1, 1]} : vector<8x2xf32> to vector<8x1xf32>
    %6 = arith.fptosi %5 : vector<8x1xf32> to vector<8x1xi32>
    %7 = vector.extract_strided_slice %4 {offsets = [0, 1], sizes = [8, 1], strides = [1, 1]} : vector<8x2xf32> to vector<8x1xf32>
    %8 = tpu.iota {dimensions = array<i32: 1>} : vector<1x32xi32>
    %9 = vector.broadcast %8 : vector<1x32xi32> to vector<8x32xi32>
    %10 = vector.broadcast %6 : vector<8x1xi32> to vector<8x32xi32>
    %11 = arith.cmpi eq, %9, %10 : vector<8x32xi32>
    %c0_i32_4 = arith.constant 0 : i32
    %12 = arith.sitofp %c0_i32_4 : i32 to f32
    %13 = vector.broadcast %12 : f32 to vector<8x32xf32>
    %14 = arith.select %11, %3, %13 : vector<8x32xi1>, vector<8x32xf32>
    %cst = arith.constant dense<0.000000e+00> : vector<8xf32>
    %15 = vector.multi_reduction <add>, %14, %cst [1] : vector<8x32xf32> to vector<8xf32>
    %16 = vector.shape_cast %15 : vector<8xf32> to vector<8x1xf32>
    %c2_i32 = arith.constant 2 : i32
    %17 = arith.muli %arg0, %c2_i32 : i32
    %18 = arith.addi %17, %arg1 : i32
    %c8_i32 = arith.constant 8 : i32
    %19 = arith.muli %18, %c8_i32 : i32
    %20 = tpu.iota {dimensions = array<i32: 0>} : vector<8x1xi32>
    %21 = vector.broadcast %19 : i32 to vector<8x1xi32>
    %22 = arith.addi %21, %20 : vector<8x1xi32>
    %c16_i32 = arith.constant 16 : i32
    %23 = vector.broadcast %c16_i32 : i32 to vector<8x1xi32>
    %24 = arith.cmpi slt, %22, %23 : vector<8x1xi32>
    %cst_5 = arith.constant 0.000000e+00 : f32
    %25 = vector.broadcast %cst_5 : f32 to vector<8x1xf32>
    %26 = arith.subf %25, %16 : vector<8x1xf32>
    %27 = arith.mulf %26, %7 : vector<8x1xf32>
    %cst_6 = arith.constant 0.000000e+00 : f32
    %28 = vector.broadcast %cst_6 : f32 to vector<8x1xf32>
    %29 = arith.select %24, %27, %28 : vector<8x1xi1>, vector<8x1xf32>
    %cst_7 = arith.constant 0.000000e+00 : f32
    %30 = vector.broadcast %cst_7 : f32 to vector<8x1xf32>
    %31 = arith.select %24, %7, %30 : vector<8x1xi1>, vector<8x1xf32>
    %c0_8 = arith.constant 0 : index
    %c0_9 = arith.constant 0 : index
    %c0_10 = arith.constant 0 : index
    %32 = vector.load %arg4[%c0_8, %c0_9, %c0_10] : memref<1x1x1xf32, #tpu.memory_space<vmem>>, vector<1x1x1xf32>
    %33 = vector.shape_cast %29 : vector<8x1xf32> to vector<1x8x1xf32>
    %cst_11 = arith.constant dense<0.000000e+00> : vector<1xf32>
    %34 = vector.multi_reduction <add>, %33, %cst_11 [1, 2] : vector<1x8x1xf32> to vector<1xf32>
    %35 = vector.shape_cast %34 : vector<1xf32> to vector<1x1x1xf32>
    %36 = vector.extract %35[0, 0, 0] : f32 from vector<1x1x1xf32>
    %37 = vector.broadcast %36 : f32 to vector<1x1x1xf32>
    %38 = arith.addf %32, %37 : vector<1x1x1xf32>
    %c0_12 = arith.constant 0 : index
    %c0_13 = arith.constant 0 : index
    %c0_14 = arith.constant 0 : index
    %39 = vector.load %arg4[%c0_12, %c0_13, %c0_14] : memref<1x1x1xf32, #tpu.memory_space<vmem>>, vector<1x1x1xf32>
    tpu.vector_store %arg4[%c0_12, %c0_13, %c0_14], %38 {strides = array<i32>} : memref<1x1x1xf32, #tpu.memory_space<vmem>>, vector<1x1x1xf32>,
    %c0_15 = arith.constant 0 : index
    %c0_16 = arith.constant 0 : index
    %c0_17 = arith.constant 0 : index
    %40 = vector.load %arg5[%c0_15, %c0_16, %c0_17] : memref<1x1x1xf32, #tpu.memory_space<vmem>>, vector<1x1x1xf32>
    %41 = vector.shape_cast %31 : vector<8x1xf32> to vector<1x8x1xf32>
    %cst_18 = arith.constant dense<0.000000e+00> : vector<1xf32>
    %42 = vector.multi_reduction <add>, %41, %cst_18 [1, 2] : vector<1x8x1xf32> to vector<1xf32>
    %43 = vector.shape_cast %42 : vector<1xf32> to vector<1x1x1xf32>
    %44 = vector.extract %43[0, 0, 0] : f32 from vector<1x1x1xf32>
    %45 = vector.broadcast %44 : f32 to vector<1x1x1xf32>
    %46 = arith.addf %40, %45 : vector<1x1x1xf32>
    %c0_19 = arith.constant 0 : index
    %c0_20 = arith.constant 0 : index
    %c0_21 = arith.constant 0 : index
    %47 = vector.load %arg5[%c0_19, %c0_20, %c0_21] : memref<1x1x1xf32, #tpu.memory_space<vmem>>, vector<1x1x1xf32>
    tpu.vector_store %arg5[%c0_19, %c0_20, %c0_21], %46 {strides = array<i32>} : memref<1x1x1xf32, #tpu.memory_space<vmem>>, vector<1x1x1xf32>,
    return
  }
  func.func @transform_0(%arg0: i32, %arg1: i32) -> (i32, i32) {
    %c2_i32 = arith.constant 2 : i32
    %0 = arith.muli %arg0, %c2_i32 : i32
    %1 = arith.addi %0, %arg1 : i32
    %c0_i32 = arith.constant 0 : i32
    %c0_i32_0 = arith.constant 0 : i32
    return %1, %c0_i32 : i32, i32
  }
  func.func @transform_1(%arg0: i32, %arg1: i32) -> (i32, i32) {
    %c2_i32 = arith.constant 2 : i32
    %0 = arith.muli %arg0, %c2_i32 : i32
    %1 = arith.addi %0, %arg1 : i32
    %c0_i32 = arith.constant 0 : i32
    %c0_i32_0 = arith.constant 0 : i32
    return %1, %c0_i32 : i32, i32
  }
  func.func @transform_2(%arg0: i32, %arg1: i32) -> (i32, i32, i32) {
    %c0_i32 = arith.constant 0 : i32
    %c0_i32_0 = arith.constant 0 : i32
    %c0_i32_1 = arith.constant 0 : i32
    return %arg0, %c0_i32, %c0_i32_0 : i32, i32, i32
  }
  func.func @transform_3(%arg0: i32, %arg1: i32) -> (i32, i32, i32) {
    %c0_i32 = arith.constant 0 : i32
    %c0_i32_0 = arith.constant 0 : i32
    %c0_i32_1 = arith.constant 0 : i32
    return %arg0, %c0_i32, %c0_i32_0 : i32, i32, i32
  }
}

</mosaic_0001>

<llo_original>
// kernel: tpu_custom_call.1
$region0: #{tpu_custom_call.1}
  #allocation0 [shape = 'u32[]', space=smem, size = 0x4, offset = 0x4, fixed_abs, tag = 'smem constant byte address 0x4 - core index']
  #allocation1 [shape = 'u32[72,128]{1,0:T(1,128)}', space=vmem, size = 0x9000, scoped, tag = 'internal scratch']
  %s0 = inlined_call_operand.vmem [shape: f32[16,32], index: 0, kind: input, shape index: {}]
  %s1 = inlined_call_operand.vmem [shape: f32[16,2], index: 1, kind: input, shape index: {}]
  %s2 = inlined_call_operand.hbm [shape: f32[1,1,1], index: 2, kind: output, shape index: {0}]
  %s3 = inlined_call_operand.hbm [shape: f32[1,1,1], index: 3, kind: output, shape index: {1}]
  %4 = xla_tuple %s2, %s3
  %s5 = sld [smem:[#allocation0]]
  $region53: #{tpu_custom_call.1} parent=0
    _
  %s7 = ssub.s32 1, %s5
  %s8 = scalar_select 0, %s7, %s5
  $region1: #{tpu_custom_call.1} parent=0
    #allocation2 [shape = 'u8[512]{0}', space=vmem, size = 0x400, scoped, tag = 'output window, operand 0, single buffered']
    #allocation3 [shape = 's32[2]{0}', space=sflag, size = 0x8, scoped, tag = 'scoped memory for tpu_custom_call.1']
    #allocation4 [shape = 'u8[512]{0}', space=vmem, size = 0x400, scoped, tag = 'output window, operand 1, single buffered']
    #allocation5 [shape = 's32[1]{0}', space=sflag, size = 0x4, scoped, tag = 'scoped memory for tpu_custom_call.1']
    %9 = vsyncpa [#allocation3], 0
    %10 = vsyncpa [#allocation5], 0
    loop: start=0, step=1, limit=4
    $region2: #{tpu_custom_call.1} parent=1 // loop_pre_header
      _
    $region3: #{tpu_custom_call.1} parent=1 // loop_header
      %s12 = sphi 0, %s16
      %p13 = scmp.ge.s32.totalorder %s12, 4
      %s19 = sphi 0, %s31
      %s20 = sphi 0, %s27
      %s21 = sphi 0, %s19
      %s22 = sphi 0, %s20
      %s23 = sphi 0, %s21
      %s24 = sphi 0, %s22
      %s38 = sphi 0, %s40
      %s41 = sphi 0, %s38
      %s42 = sphi 0, %s41
      %s58 = sphi 0, %s42
      %s68 = sphi 0, %s70
      %s71 = sphi 0, %s68
      %s72 = sphi 0, %s71
      %s88 = sphi 0, %s72
      %s94 = sphi 0, %s96
      %s97 = sphi 0, %s94
      %s98 = sphi 0, %s97
      %s114 = sphi 0, %s98
      %s120 = sphi 0, %s122
      %s123 = sphi 0, %s120
      %s124 = sphi 0, %s123
      %s140 = sphi 0, %s124
    $region4: #{tpu_custom_call.1} parent=1 // loop_header_branch
      %15 = sbr.rel (%p13) target = $region8
    $region5: #{tpu_custom_call.1} parent=1 // loop_body
      %s17 = ssub.s32 %s12, 1
      %s18 = ssub.s32 %s12, 2
      %s25 = sadd.s32 1, %s20
      %p26 = scmp.ge.s32.totalorder %s25, 2
      %s27 = scalar_select %p26, 0, %s25
      %s28 = sadd.s32 1, %s19
      %s29 = scalar_select %p26, %s28, %s19
      %p30 = scmp.ge.s32.totalorder %s29, 1
      %s31 = scalar_select %p30, 0, %s29
      %s32 = smul.u32 %s19, 2
      %s33 = sadd.s32 %s32, %s20
      %s34 = smul.u32 %s31, 2
      %s35 = sadd.s32 %s34, %s27
      %s36 = ssub.s32 %s33, %s35
      %p37 = scmp.eq.s32.totalorder %s36, 0
      %s39 = sadd.s32 %s38, 1
      %s40 = scalar_select %p37, %s38, %s39
      %p43 = pneg %p37
      %p44 = scmp.eq.s32.totalorder %s12, 1
      %p45 = por %p43, %p44
      %p46 = scmp.ne.s32.totalorder %s38, %s41
      %p47 = scmp.eq.s32.totalorder %s12, 0
      %p48 = por %p46, %p47
      %p49 = scmp.ne.s32.totalorder %s38, %s41
      %p50 = scmp.eq.s32.totalorder %s17, 1
      %p51 = por %p49, %p50
      %p52 = scmp.ne.s32.totalorder %s41, %s42
      %p53 = scmp.eq.s32.totalorder %s17, 0
      %p54 = por %p52, %p53
      %p55 = scmp.ne.s32.totalorder %s41, %s42
      %p56 = scmp.eq.s32.totalorder %s18, 1
      %p57 = por %p55, %p56
      %p59 = scmp.ne.s32.totalorder %s42, %s58
      %p60 = scmp.eq.s32.totalorder %s18, 0
      %p61 = por %p59, %p60
      %s62 = smul.u32 %s19, 2
      %s63 = sadd.s32 %s62, %s20
      %s64 = smul.u32 %s31, 2
      %s65 = sadd.s32 %s64, %s27
      %s66 = ssub.s32 %s63, %s65
      %p67 = scmp.eq.s32.totalorder %s66, 0
      %s69 = sadd.s32 %s68, 1
      %s70 = scalar_select %p67, %s68, %s69
      %p73 = pneg %p67
      %p74 = scmp.eq.s32.totalorder %s12, 1
      %p75 = por %p73, %p74
      %p76 = scmp.ne.s32.totalorder %s68, %s71
      %p77 = scmp.eq.s32.totalorder %s12, 0
      %p78 = por %p76, %p77
      %p79 = scmp.ne.s32.totalorder %s68, %s71
      %p80 = scmp.eq.s32.totalorder %s17, 1
      %p81 = por %p79, %p80
      %p82 = scmp.ne.s32.totalorder %s71, %s72
      %p83 = scmp.eq.s32.totalorder %s17, 0
      %p84 = por %p82, %p83
      %p85 = scmp.ne.s32.totalorder %s71, %s72
      %p86 = scmp.eq.s32.totalorder %s18, 1
      %p87 = por %p85, %p86
      %p89 = scmp.ne.s32.totalorder %s72, %s88
      %p90 = scmp.eq.s32.totalorder %s18, 0
      %p91 = por %p89, %p90
      %s92 = ssub.s32 %s19, %s31
      %p93 = scmp.eq.s32.totalorder %s92, 0
      %s95 = sadd.s32 %s94, 1
      %s96 = scalar_select %p93, %s94, %s95
      %p99 = pneg %p93
      %p100 = scmp.eq.s32.totalorder %s12, 1
      %p101 = por %p99, %p100
      %p102 = scmp.ne.s32.totalorder %s94, %s97
      %p103 = scmp.eq.s32.totalorder %s12, 0
      %p104 = por %p102, %p103
      %p105 = scmp.ne.s32.totalorder %s94, %s97
      %p106 = scmp.eq.s32.totalorder %s17, 1
      %p107 = por %p105, %p106
      %p108 = scmp.ne.s32.totalorder %s97, %s98
      %p109 = scmp.eq.s32.totalorder %s17, 0
      %p110 = por %p108, %p109
      %p111 = scmp.ne.s32.totalorder %s97, %s98
      %p112 = scmp.eq.s32.totalorder %s18, 1
      %p113 = por %p111, %p112
      %p115 = scmp.ne.s32.totalorder %s98, %s114
      %p116 = scmp.eq.s32.totalorder %s18, 0
      %p117 = por %p115, %p116
      %s118 = ssub.s32 %s19, %s31
      %p119 = scmp.eq.s32.totalorder %s118, 0
      %s121 = sadd.s32 %s120, 1
      %s122 = scalar_select %p119, %s120, %s121
      %p125 = pneg %p119
      %p126 = scmp.eq.s32.totalorder %s12, 1
      %p127 = por %p125, %p126
      %p128 = scmp.ne.s32.totalorder %s120, %s123
      %p129 = scmp.eq.s32.totalorder %s12, 0
      %p130 = por %p128, %p129
      %p131 = scmp.ne.s32.totalorder %s120, %s123
      %p132 = scmp.eq.s32.totalorder %s17, 1
      %p133 = por %p131, %p132
      %p134 = scmp.ne.s32.totalorder %s123, %s124
      %p135 = scmp.eq.s32.totalorder %s17, 0
      %p136 = por %p134, %p135
      %p137 = scmp.ne.s32.totalorder %s123, %s124
      %p138 = scmp.eq.s32.totalorder %s18, 1
      %p139 = por %p137, %p138
      %p141 = scmp.ne.s32.totalorder %s124, %s140
      %p142 = scmp.eq.s32.totalorder %s18, 0
      %p143 = por %p141, %p142
      %p144 = scmp.le.s32.totalorder 1, %s12
      %p145 = scmp.lt.s32.totalorder %s12, 3
      %p146 = pnand %p144, %p145
      %p147 = pneg %p146
      // Predicated region
      $region9: #{tpu_custom_call.1} parent=5 // pred_check
        _
      $region10: #{tpu_custom_call.1} parent=5 // pred_check_branch
        %149 = sbr.rel (%p146) target = $region12
      $region11: #{tpu_custom_call.1} parent=5 // pred_region
        %s150 = ssub.s32 %s12, 1
      $region12: #{tpu_custom_call.1} parent=5 // pred_fallthru
        _
      %p151 = scmp.lt.s32.totalorder %s12, 2
      // Predicated region
      $region13: #{tpu_custom_call.1} parent=5 // pred_check
        %p152 = pneg %p151
      $region14: #{tpu_custom_call.1} parent=5 // pred_check_branch
        %154 = sbr.rel (%p152) target = $region16
      $region15: #{tpu_custom_call.1} parent=5 // pred_region
        // Predicated region
        $region17: #{tpu_custom_call.1} parent=15 // pred_check
          %p155 = pneg %p48
        $region18: #{tpu_custom_call.1} parent=15 // pred_check_branch
          %157 = sbr.rel (%p155) target = $region20
        $region19: #{tpu_custom_call.1} parent=15 // pred_region
          %s158 = smul.u32 %s19, 2
          %s159 = sadd.s32 %s158, %s20
          %p160 = scmp.lt.s32.totalorder %s159, 1
          %s161 = scalar_select %p160, %s159, 1
          %s162 = smul.addr %s161, 8
          %s163 = scalar_lea.vmem %s0, %s162
          %s164 = smul.u32 %s19, 2
          %s165 = sadd.s32 %s164, %s20
        $region20: #{tpu_custom_call.1} parent=15 // pred_fallthru
          _
        // Predicated region
        $region21: #{tpu_custom_call.1} parent=15 // pred_check
          %p166 = pneg %p78
        $region22: #{tpu_custom_call.1} parent=15 // pred_check_branch
          %168 = sbr.rel (%p166) target = $region24
        $region23: #{tpu_custom_call.1} parent=15 // pred_region
          %s169 = smul.u32 %s19, 2
          %s170 = sadd.s32 %s169, %s20
          %p171 = scmp.lt.s32.totalorder %s170, 1
          %s172 = scalar_select %p171, %s170, 1
          %s173 = smul.addr %s172, 8
          %s174 = scalar_lea.vmem %s1, %s173
          %s175 = smul.u32 %s19, 2
          %s176 = sadd.s32 %s175, %s20
        $region24: #{tpu_custom_call.1} parent=15 // pred_fallthru
          _
      $region16: #{tpu_custom_call.1} parent=5 // pred_fallthru
        _
      %p177 = scmp.le.s32.totalorder 1, %s12
      %p178 = scmp.lt.s32.totalorder %s12, 3
      %p179 = pnand %p177, %p178
      %p180 = pneg %p179
      // Predicated region
      $region25: #{tpu_custom_call.1} parent=5 // pred_check
        _
      $region26: #{tpu_custom_call.1} parent=5 // pred_check_branch
        %182 = sbr.rel (%p179) target = $region28
      $region27: #{tpu_custom_call.1} parent=5 // pred_region
        %s183 = ssub.s32 %s12, 1
        %s184 = smul.u32 %s21, 2
        %s185 = sadd.s32 %s184, %s22
        %p186 = scmp.lt.s32.totalorder %s185, 1
        %s187 = scalar_select %p186, %s185, 1
        %s188 = smul.addr %s187, 8
        %s189 = scalar_lea.vmem %s0, %s188
        %p190 = pneg %p54
        %p191 = pneg %p51
        %s192 = smul.u32 %s21, 2
        %s193 = sadd.s32 %s192, %s22
        %p194 = scmp.lt.s32.totalorder %s193, 1
        %s195 = scalar_select %p194, %s193, 1
        %s196 = smul.addr %s195, 8
        %s197 = scalar_lea.vmem %s1, %s196
        %p198 = pneg %p84
        %p199 = pneg %p81
        %p200 = pneg %p110
        %p201 = pneg %p107
        %p202 = pneg %p136
        %p203 = pneg %p133
        %s204 = smul.u32 %s21, 2
        %s205 = sadd.s32 %s204, %s22
        %p206 = scmp.lt.s32.totalorder %s205, 1
        %s207 = scalar_select %p206, %s205, 1
        %s208 = smul.addr %s207, 8
        %s209 = scalar_lea.vmem %s0, %s208
        %s210 = smul.u32 %s21, 2
        %s211 = sadd.s32 %s210, %s22
        %s212 = smul.u32 %s21, 2
        %s213 = sadd.s32 %s212, %s22
        %p214 = scmp.lt.s32.totalorder %s213, 1
        %s215 = scalar_select %p214, %s213, 1
        %s216 = smul.addr %s215, 8
        %s217 = scalar_lea.vmem %s1, %s216
        %s218 = smul.u32 %s21, 2
        %s219 = sadd.s32 %s218, %s22
        %p220 = scmp.eq.s32.totalorder %s22, 0
        // Predicated region
        $region29: #{tpu_custom_call.1} parent=27 // pred_check
          %p221 = pneg %p220
        $region30: #{tpu_custom_call.1} parent=27 // pred_check_branch
          %223 = sbr.rel (%p221) target = $region32
        $region31: #{tpu_custom_call.1} parent=27 // pred_region
          %vm224 = vcmask 0
          %225 = vst.msk [vmem:[#allocation2] sm:$0x1] %vm224, 0.0
          %226 = vst.msk [vmem:[#allocation4] sm:$0x1] %vm224, 0.0
        $region32: #{tpu_custom_call.1} parent=27 // pred_fallthru
          _
        %v227 = vld [vmem:[%s209] sm:$0xff]
        %v228 = vld [vmem:[%s217] sm:$0xff]
        %v229 = vcvt.f32.s32.to.zero.pseudo %v228
        %v230 = vlaneseq
        %v231 = vand.u32 %v230, 127
        %232 = vset.pattern.permute.xlu0 0
        %233 = vperm.xlu0 %232, %v229
        %v234 = vpop.permute.xlu0 %233
        %vm235 = vcmp.eq.s32.totalorder %v231, %v234
        %v236 = vsel %vm235, %v227, 0.0
        %vm237 = vcmask 261120
        %v238 = vsel %vm237, %v236, 0.0
        %239 = vadd.xlane.f32.xlu0 %v238
        %v240 = vpop.xlane.xlu0 %239
        %s241 = smul.u32 %s21, 2
        %s242 = sadd.s32 %s241, %s22
        %s243 = smul.u32 %s242, 8
        %v244 = vlaneseq
        %v245 = vshrl.u32 %v244, 7
        %v246 = vstv %s243
        %v247 = vadd.s32 %v246, %v245
        %vm248 = vcmp.lt.s32.totalorder %v247, 16
        %v249 = vsub.f32 0.0, %v240
        %v250 = vmul.f32 %v249, %v228
        %v251 = vsel %vm248, %v250, 0.0
        %v252 = vsel %vm248, %v228, 0.0
        %v253 = vld [vmem:[#allocation2] sm:$0x1]
        %255 = vrot.lane.b32.xlu0 %v251, 127
        %v256 = vpop.permute.xlu0 %255
        %vm258 = vcmask 7168
        %v259 = vsel %vm258, %v256, 0.0
        %260 = vadd.xlane.f32.xlu0 %v259
        %v261 = vpop.xlane.xlu0 %260
        %v262 = vrot.slane %v261, 4
        %v263 = vadd.f32 %v261, %v262
        %v264 = vrot.slane %v263, 2
        %v265 = vadd.f32 %v263, %v264
        %v266 = vrot.slane %v265, 1
        %v267 = vadd.f32 %v265, %v266
        %s268 = vtos %v267
        %v269 = vstv %s268
        %v270 = vadd.f32 %v253, %v269
        %vm271 = vcmask 0
        %272 = vst.msk [vmem:[#allocation2] sm:$0x1] %vm271, %v270
        %v273 = vld [vmem:[#allocation4] sm:$0x1]
        %275 = vrot.lane.b32.xlu0 %v252, 127
        %v276 = vpop.permute.xlu0 %275
        %v278 = vsel %vm258, %v276, 0.0
        %279 = vadd.xlane.f32.xlu0 %v278
        %v280 = vpop.xlane.xlu0 %279
        %v281 = vrot.slane %v280, 4
        %v282 = vadd.f32 %v280, %v281
        %v283 = vrot.slane %v282, 2
        %v284 = vadd.f32 %v282, %v283
        %v285 = vrot.slane %v284, 1
        %v286 = vadd.f32 %v284, %v285
        %s287 = vtos %v286
        %v288 = vstv %s287
        %v289 = vadd.f32 %v273, %v288
        %290 = vst.msk [vmem:[#allocation4] sm:$0x1] %vm271, %v289
        // Predicated region
        $region33: #{tpu_custom_call.1} parent=27 // pred_check
          %p291 = pneg %p107
        $region34: #{tpu_custom_call.1} parent=27 // pred_check_branch
          %293 = sbr.rel (%p291) target = $region36
        $region35: #{tpu_custom_call.1} parent=27 // pred_region
          %295 = vsyncadd [#allocation3], 0
          %s296 = scalar_lea.hbm %s2, %s21
          %s298 = sshll.u32 [#allocation2], 4
          %s299 = int_to_ptr.vmem [resolvable:$true] %s298
          %s300 = sshll.u32 %s296, 4
          %s301 = int_to_ptr.hbm [resolvable:$true] %s300
          %303 = dma.vmem_to_hbm [thread:$0]  %s299, 16, %s301, [#allocation3]
        $region36: #{tpu_custom_call.1} parent=27 // pred_fallthru
          _
        // Predicated region
        $region37: #{tpu_custom_call.1} parent=27 // pred_check
          %p304 = pneg %p133
        $region38: #{tpu_custom_call.1} parent=27 // pred_check_branch
          %306 = sbr.rel (%p304) target = $region40
        $region39: #{tpu_custom_call.1} parent=27 // pred_region
          %308 = vsyncadd [#allocation5], 0
          %s309 = scalar_lea.hbm %s3, %s21
          %s311 = sshll.u32 [#allocation4], 4
          %s312 = int_to_ptr.vmem [resolvable:$true] %s311
          %s313 = sshll.u32 %s309, 4
          %s314 = int_to_ptr.hbm [resolvable:$true] %s313
          %316 = dma.vmem_to_hbm [thread:$0]  %s312, 16, %s314, [#allocation5]
        $region40: #{tpu_custom_call.1} parent=27 // pred_fallthru
          _
        // Predicated region
        $region41: #{tpu_custom_call.1} parent=27 // pred_check
          %p317 = pneg %p107
        $region42: #{tpu_custom_call.1} parent=27 // pred_check_branch
          %319 = sbr.rel (%p317) target = $region44
        $region43: #{tpu_custom_call.1} parent=27 // pred_region
          %321 = dma.done [#allocation3], 16
        $region44: #{tpu_custom_call.1} parent=27 // pred_fallthru
          _
        // Predicated region
        $region45: #{tpu_custom_call.1} parent=27 // pred_check
          %p322 = pneg %p133
        $region46: #{tpu_custom_call.1} parent=27 // pred_check_branch
          %324 = sbr.rel (%p322) target = $region48
        $region47: #{tpu_custom_call.1} parent=27 // pred_region
          %326 = dma.done [#allocation5], 16
        $region48: #{tpu_custom_call.1} parent=27 // pred_fallthru
          _
      $region28: #{tpu_custom_call.1} parent=5 // pred_fallthru
        _
      %p327 = scmp.le.s32.totalorder 2, %s12
      // Predicated region
      $region49: #{tpu_custom_call.1} parent=5 // pred_check
        %p328 = pneg %p327
      $region50: #{tpu_custom_call.1} parent=5 // pred_check_branch
        %330 = sbr.rel (%p328) target = $region52
      $region51: #{tpu_custom_call.1} parent=5 // pred_region
        %s331 = ssub.s32 %s12, 2
      $region52: #{tpu_custom_call.1} parent=5 // pred_fallthru
        _
    $region6: #{tpu_custom_call.1} parent=1 // loop_footer
      %s16 = sadd.s32 1, %s12
    $region7: #{tpu_custom_call.1} parent=1 // loop_footer_branch
      %11 = sbr.rel target = $region3
    $region8: #{tpu_custom_call.1} parent=1 // loop_exit
      _
    %332 = vsyncpa [#allocation3], 1
    %s333 = scalar_lea.sflag [#allocation3], 1
    %334 = vsyncpa %s333, 1
    %335 = vsyncpa [#allocation5], 1

</llo_original>
